<compile_context>
chip_gen: v6e
topology: v6e:2x2x1
jax: 0.10.0
libtpu: 0.0.40
codegen_flags: <defaults>
</compile_context>

<pallas_src>
import jax
import jax.numpy as jnp
from jax.experimental import pallas as pl
from jax.experimental.pallas import tpu as pltpu


# ---------------------------------------------------------------------------
# hardware / tiling helpers
# ---------------------------------------------------------------------------
def _vmem_capacity_bytes():
    """Physical VMEM of the local TPU generation (conservative fallback)."""
    try:
        info = pltpu.get_tpu_info()
        cap = int(getattr(info, "vmem_capacity_bytes", 0) or 0)
        if cap > 0:
            return cap
    except Exception:
        pass
    return 64 << 20          # v7x physical VMEM — safe lower bound


def _choose_group(th, w):
    """Rows per upsample group: smallest divisor of TH with G*W >= 128
    (keeps the MXU contraction near its native depth) and <= 64 groups."""
    divs = [d for d in range(1, th + 1) if th % d == 0]
    cands = [d for d in divs if d * w >= 128 and th // d <= 64]
    return min(cands) if cands else th


def _plan_tiling(n, cin, cout, h, w, out_itemsize, budget):
    """Pick TH (source rows per grid step) with an honest VMEM cost model."""
    in_itemsize = 2          # bf16 inputs to the MXU
    cands = [d for d in range(1, h + 1)
             if h % d == 0 and ((d * w) % 128 == 0 or d == h)]

    def cost(th):
        g = _choose_group(th, w)
        s, gw = th * w, g * w
        in_blk = cin * s * in_itemsize                  # x block (bf16)
        out_blk = cout * 4 * s * out_itemsize           # output block
        consts = cout * cin * 2 + cout * 4 + gw * 4 * gw * 2   # w, b, U
        scratch = cout * s * 4                          # f32 y scratch
        interm = cout * s * 4 + cout * 4 * gw * 4       # conv result + one up_g
        return 2 * (in_blk + out_blk) + consts + scratch + interm

    fitting = [t for t in cands if cost(t) <= budget]

    chosen = None
    if fitting:
        if n == 1:
            # keep >= 2 grid points so both v7x TensorCores get work
            multi = [t for t in fitting if h // t >= 2]
            if multi:
                chosen = max(multi)
        if chosen is None:
            chosen = max(fitting)
    else:
        chosen = min(cands, key=cost)

    g = _choose_group(chosen, w)
    return chosen, g, cost(chosen)


def _const_spec_kwargs():
    """Single-buffer constant operands when pipeline_mode/Buffered exists."""
    try:
        kw = {"pipeline_mode": pl.Buffered(1)}
        pl.BlockSpec((8, 128), lambda n, t: (0, 0), **kw)   # probe construction
        return kw
    except Exception:
        return {}


# ---------------------------------------------------------------------------
# kernel
# ---------------------------------------------------------------------------
def _make_kernel(gw, num_groups):
    def kernel(x_ref, w_ref, b_ref, u_ref, o_ref, y_scr):
        # x_ref: (1, Cin, S) bf16      S = TH*W flattened spatial rows
        # w_ref: (Cout, Cin) bf16      1x1 conv weight with BN scale folded in
        # b_ref: (Cout, 1)   f32       folded BN bias
        # u_ref: (GW, 4*GW)  bf16      0/1 nearest-neighbour 2x copy matrix
        # o_ref: (1, Cout, 4*S)        upsampled rows, flat (TH, 2, 2W) order
        # y_scr: (Cout, S)   f32       staged conv+BN+ReLU result
        y = jnp.dot(w_ref[...], x_ref[0],
                    preferred_element_type=jnp.float32)       # 1x1 conv (MXU)
        y_scr[...] = jnp.maximum(y + b_ref[...], 0.0)         # BN bias + ReLU

        # 2x nearest upsample: per G-row group one small copy-matmul and one
        # contiguous lane-slice store (chunked compute -> store).
        for g in range(num_groups):
            a = g * gw
            seg = y_scr[:, a:a + gw].astype(jnp.bfloat16)     # (Cout, GW)
            up = jnp.dot(seg, u_ref[...],
                         preferred_element_type=jnp.float32)  # (Cout, 4GW)
            o_ref[0, :, 4 * a:4 * (a + gw)] = up.astype(o_ref.dtype)

    return kernel


# ---------------------------------------------------------------------------
# wrapper
# ---------------------------------------------------------------------------
def transition_forward(x_nchw, conv_w, bn_gamma, bn_beta, bn_mean, bn_var,
                       eps=1e-5, out_dtype=None):
    """x_nchw: (N, Cin, H, W).  Returns (N, Cout, 2H, 2W) in `out_dtype`
    (default: x dtype; pass jnp.bfloat16 to halve the dominant write-back)."""
    N, Cin, H, W = x_nchw.shape
    Cout = conv_w.shape[0]                         # conv_w: (Cout, Cin, 1, 1)
    out_dtype = jnp.dtype(x_nchw.dtype) if out_dtype is None else jnp.dtype(out_dtype)

    # ---- fold BN (eval semantics) into the 1x1 conv, cast weights for the MXU
    # TODO(synk): BatchNorm training-mode statistics are not modelled (eval only).
    scale = bn_gamma / jnp.sqrt(bn_var + eps)                      # (Cout,)
    w_mat = (conv_w[:, :, 0, 0] * scale[:, None]).astype(jnp.bfloat16)
    bias = (bn_beta - bn_mean * scale).reshape(Cout, 1).astype(jnp.float32)

    # ---- generation-aware tiling ----
    phys = _vmem_capacity_bytes()
    budget = int(phys * 0.7)
    TH, G, need = _plan_tiling(N, Cin, Cout, H, W, out_dtype.itemsize, budget)
    S, GW = TH * W, G * W
    num_groups = TH // G
    vmem_limit = int(min(phys * 0.9, max(32 << 20, need * 1.3)))

    # ---- per-group 0/1 nearest-neighbour 2x copy matrix (GW, 4GW), bf16 exact
    # output-local flat index p maps to source pixel:
    #   row = p // (4W), col = (p % (2W)) // 2
    p = jnp.arange(4 * GW)
    src = (p // (4 * W)) * W + (p % (2 * W)) // 2                  # (4GW,)
    U = (src[None, :] == jnp.arange(GW)[:, None]).astype(jnp.bfloat16)

    # free row-major reshape; bf16 cast feeds the MXU and halves x HBM traffic
    # (in a full network the producing layer should emit bf16 so this fuses).
    x_flat = x_nchw.reshape(N, Cin, H * W).astype(jnp.bfloat16)

    const_kw = _const_spec_kwargs()

    call_kwargs = {}
    try:
        flops = 2 * N * H * W * Cout * Cin + 8 * N * H * W * Cout * GW
        bytes_accessed = (x_flat.size * 2 + w_mat.size * 2 + bias.size * 4
                          + U.size * 2
                          + N * Cout * 4 * H * W * out_dtype.itemsize)
        call_kwargs["cost_estimate"] = pl.CostEstimate(
            flops=int(flops), transcendentals=0,
            bytes_accessed=int(bytes_accessed))
    except Exception:
        pass

    out_flat = pl.pallas_call(
        _make_kernel(GW, num_groups),
        out_shape=jax.ShapeDtypeStruct((N, Cout, 4 * H * W), out_dtype),
        grid_spec=pltpu.PrefetchScalarGridSpec(
            num_scalar_prefetch=0,
            grid=(N, H // TH),
            in_specs=[
                pl.BlockSpec((1, Cin, S), lambda n, t: (n, 0, t)),
                pl.BlockSpec((Cout, Cin), lambda n, t: (0, 0), **const_kw),
                pl.BlockSpec((Cout, 1), lambda n, t: (0, 0), **const_kw),
                pl.BlockSpec((GW, 4 * GW), lambda n, t: (0, 0), **const_kw),
            ],
            out_specs=pl.BlockSpec((1, Cout, 4 * S), lambda n, t: (n, 0, t)),
            scratch_shapes=[pltpu.VMEM((Cout, S), jnp.float32)],
        ),
        compiler_params=pltpu.CompilerParams(
            dimension_semantics=("parallel", "parallel"),
            vmem_limit_bytes=vmem_limit),
        **call_kwargs,
    )(x_flat, w_mat, bias, U)

    # flat per-block (TH, 2, 2W) order == row-major (2H, 2W): free reshape
    return out_flat.reshape(N, Cout, 2 * H, 2 * W)


# ---------------------------------------------------------------------------
# pure-JAX reference of the PyTorch forward (eval-mode BN)
# ---------------------------------------------------------------------------
def _reference(x_nchw, conv_w, bn_gamma, bn_beta, bn_mean, bn_var, eps=1e-5):
    y = jax.lax.conv_general_dilated(
        x_nchw, conv_w, window_strides=(1, 1), padding="VALID",
        dimension_numbers=("NCHW", "OIHW", "NCHW"))
    scale = bn_gamma / jnp.sqrt(bn_var + eps)
    bias = bn_beta - bn_mean * scale
    y = y * scale[None, :, None, None] + bias[None, :, None, None]
    y = jnp.maximum(y, 0.0)
    y = jnp.repeat(jnp.repeat(y, 2, axis=2), 2, axis=3)      # nearest x2
    return y


if __name__ == "__main__":
    key = jax.random.PRNGKey(0)
    N, Cin, H, W = 2, 4, 16, 16
    Cout = Cin // 2

    k0, k1, k2, k3, k4, k5 = jax.random.split(key, 6)
    x = jax.random.normal(k0, (N, Cin, H, W), dtype=jnp.float32)
    conv_w = jax.random.normal(k1, (Cout, Cin, 1, 1), dtype=jnp.float32) * 0.1
    bn_gamma = 1.0 + 0.1 * jax.random.normal(k2, (Cout,), dtype=jnp.float32)
    bn_beta = 0.1 * jax.random.normal(k3, (Cout,), dtype=jnp.float32)
    bn_mean = 0.05 * jax.random.normal(k4, (Cout,), dtype=jnp.float32)
    bn_var = jnp.abs(1.0 + 0.1 * jax.random.normal(k5, (Cout,),
                                                   dtype=jnp.float32))

    out = transition_forward(x, conv_w, bn_gamma, bn_beta, bn_mean, bn_var)
    out = jax.block_until_ready(out)

    ref = _reference(x, conv_w, bn_gamma, bn_beta, bn_mean, bn_var)
    assert out.shape == (N, Cout, 2 * H, 2 * W)
    # bf16 MXU feed -> compare with relaxed tolerance against the f32 reference
    assert jnp.allclose(out.astype(jnp.float32), ref, atol=2e-2, rtol=2e-2)
    print("KERNEL_OK")
</pallas_src>

<mosaic_0001>
module attributes {stable_mosaic.version = 11 : i64} {
  func.func @kernel(%arg0: i32, %arg1: i32, %arg2: memref<1x4x256xbf16, #tpu.memory_space<vmem>>, %arg3: memref<2x4xbf16, #tpu.memory_space<vmem>>, %arg4: memref<2x1xf32, #tpu.memory_space<vmem>>, %arg5: memref<128x512xbf16, #tpu.memory_space<vmem>>, %arg6: memref<1x2x1024xf32, #tpu.memory_space<vmem>>, %arg7: memref<2x256xf32, #tpu.memory_space<vmem>>) attributes {dimension_semantics = [#tpu.dimension_semantics<parallel>, #tpu.dimension_semantics<parallel>], iteration_bounds = array<i64: 2, 1>, scalar_prefetch = 0 : i64, scratch_operands = 1 : i64, tpu.core_type = #tpu.core_type<tc>, window_params = [{transform_indices = @transform_0, window_bounds = array<i64: 1, 4, 256>}, {pipeline_mode = #tpu.pipeline_mode<synchronous>, transform_indices = @transform_1, window_bounds = array<i64: 2, 4>}, {pipeline_mode = #tpu.pipeline_mode<synchronous>, transform_indices = @transform_2, window_bounds = array<i64: 2, 1>}, {pipeline_mode = #tpu.pipeline_mode<synchronous>, transform_indices = @transform_3, window_bounds = array<i64: 128, 512>}, {transform_indices = @transform_4, window_bounds = array<i64: 1, 2, 1024>}]} {
    %c0 = arith.constant 0 : index
    %c0_0 = arith.constant 0 : index
    %0 = vector.load %arg3[%c0, %c0_0] : memref<2x4xbf16, #tpu.memory_space<vmem>>, vector<2x4xbf16>
    %c0_1 = arith.constant 0 : index
    %c0_2 = arith.constant 0 : index
    %c0_3 = arith.constant 0 : index
    %1 = vector.load %arg2[%c0_1, %c0_2, %c0_3] : memref<1x4x256xbf16, #tpu.memory_space<vmem>>, vector<1x4x256xbf16>
    %2 = vector.shape_cast %1 : vector<1x4x256xbf16> to vector<4x256xbf16>
    %cst = arith.constant dense<0.000000e+00> : vector<2x256xf32>
    %3 = tpu.matmul %0, %2, %cst {dimension_numbers = #tpu.dot_dimension_numbers<[1], [0], [0], [1], [0, 0, 1, 1], [], []>} : vector<2x4xbf16>, vector<4x256xbf16>, vector<2x256xf32> -> vector<2x256xf32>
    %c0_4 = arith.constant 0 : index
    %c0_5 = arith.constant 0 : index
    %4 = vector.load %arg4[%c0_4, %c0_5] : memref<2x1xf32, #tpu.memory_space<vmem>>, vector<2x1xf32>
    %5 = vector.broadcast %4 : vector<2x1xf32> to vector<2x256xf32>
    %6 = arith.addf %3, %5 : vector<2x256xf32>
    %cst_6 = arith.constant 0.000000e+00 : f32
    %7 = vector.broadcast %cst_6 : f32 to vector<2x256xf32>
    %8 = arith.maximumf %6, %7 : vector<2x256xf32>
    %c0_7 = arith.constant 0 : index
    %c0_8 = arith.constant 0 : index
    %9 = vector.load %arg7[%c0_7, %c0_8] : memref<2x256xf32, #tpu.memory_space<vmem>>, vector<2x256xf32>
    tpu.vector_store %arg7[%c0_7, %c0_8], %8 {strides = array<i32>} : memref<2x256xf32, #tpu.memory_space<vmem>>, vector<2x256xf32>,
    %c0_9 = arith.constant 0 : index
    %c0_10 = arith.constant 0 : index
    %10 = vector.load %arg7[%c0_9, %c0_10] : memref<2x256xf32, #tpu.memory_space<vmem>>, vector<2x128xf32>
    %11 = arith.truncf %10 : vector<2x128xf32> to vector<2x128xbf16>
    %c0_11 = arith.constant 0 : index
    %c0_12 = arith.constant 0 : index
    %12 = vector.load %arg5[%c0_11, %c0_12] : memref<128x512xbf16, #tpu.memory_space<vmem>>, vector<128x512xbf16>
    %cst_13 = arith.constant dense<0.000000e+00> : vector<2x512xf32>
    %13 = tpu.matmul %11, %12, %cst_13 {dimension_numbers = #tpu.dot_dimension_numbers<[1], [0], [0], [1], [0, 0, 1, 1], [], []>} : vector<2x128xbf16>, vector<128x512xbf16>, vector<2x512xf32> -> vector<2x512xf32>
    %c0_14 = arith.constant 0 : index
    %c0_15 = arith.constant 0 : index
    %c0_16 = arith.constant 0 : index
    %14 = vector.load %arg6[%c0_14, %c0_15, %c0_16] : memref<1x2x1024xf32, #tpu.memory_space<vmem>>, vector<1x2x512xf32>
    %15 = vector.shape_cast %14 : vector<1x2x512xf32> to vector<2x512xf32>
    %16 = vector.shape_cast %13 : vector<2x512xf32> to vector<1x2x512xf32>
    tpu.vector_store %arg6[%c0_14, %c0_15, %c0_16], %16 {strides = array<i32>} : memref<1x2x1024xf32, #tpu.memory_space<vmem>>, vector<1x2x512xf32>,
    %c0_17 = arith.constant 0 : index
    %c128 = arith.constant 128 : index
    %17 = vector.load %arg7[%c0_17, %c128] : memref<2x256xf32, #tpu.memory_space<vmem>>, vector<2x128xf32>
    %18 = arith.truncf %17 : vector<2x128xf32> to vector<2x128xbf16>
    %c0_18 = arith.constant 0 : index
    %c0_19 = arith.constant 0 : index
    %19 = vector.load %arg5[%c0_18, %c0_19] : memref<128x512xbf16, #tpu.memory_space<vmem>>, vector<128x512xbf16>
    %cst_20 = arith.constant dense<0.000000e+00> : vector<2x512xf32>
    %20 = tpu.matmul %18, %19, %cst_20 {dimension_numbers = #tpu.dot_dimension_numbers<[1], [0], [0], [1], [0, 0, 1, 1], [], []>} : vector<2x128xbf16>, vector<128x512xbf16>, vector<2x512xf32> -> vector<2x512xf32>
    %c0_21 = arith.constant 0 : index
    %c0_22 = arith.constant 0 : index
    %c512 = arith.constant 512 : index
    %21 = vector.load %arg6[%c0_21, %c0_22, %c512] : memref<1x2x1024xf32, #tpu.memory_space<vmem>>, vector<1x2x512xf32>
    %22 = vector.shape_cast %21 : vector<1x2x512xf32> to vector<2x512xf32>
    %23 = vector.shape_cast %20 : vector<2x512xf32> to vector<1x2x512xf32>
    tpu.vector_store %arg6[%c0_21, %c0_22, %c512], %23 {strides = array<i32>} : memref<1x2x1024xf32, #tpu.memory_space<vmem>>, vector<1x2x512xf32>,
    return
  }
  func.func @transform_0(%arg0: i32, %arg1: i32) -> (i32, i32, i32) {
    %c0_i32 = arith.constant 0 : i32
    %c0_i32_0 = arith.constant 0 : i32
    return %arg0, %c0_i32, %arg1 : i32, i32, i32
  }
  func.func @transform_1(%arg0: i32, %arg1: i32) -> (i32, i32) {
    %c0_i32 = arith.constant 0 : i32
    %c0_i32_0 = arith.constant 0 : i32
    %c0_i32_1 = arith.constant 0 : i32
    return %c0_i32, %c0_i32_0 : i32, i32
  }
  func.func @transform_2(%arg0: i32, %arg1: i32) -> (i32, i32) {
    %c0_i32 = arith.constant 0 : i32
    %c0_i32_0 = arith.constant 0 : i32
    %c0_i32_1 = arith.constant 0 : i32
    return %c0_i32, %c0_i32_0 : i32, i32
  }
  func.func @transform_3(%arg0: i32, %arg1: i32) -> (i32, i32) {
    %c0_i32 = arith.constant 0 : i32
    %c0_i32_0 = arith.constant 0 : i32
    %c0_i32_1 = arith.constant 0 : i32
    return %c0_i32, %c0_i32_0 : i32, i32
  }
  func.func @transform_4(%arg0: i32, %arg1: i32) -> (i32, i32, i32) {
    %c0_i32 = arith.constant 0 : i32
    %c0_i32_0 = arith.constant 0 : i32
    return %arg0, %c0_i32, %arg1 : i32, i32, i32
  }
}

</mosaic_0001>

<llo_original>
// kernel: tpu_custom_call.1
$region0: #{tpu_custom_call.1}
  #allocation0 [shape = 'u32[]', space=smem, size = 0x4, offset = 0x4, fixed_abs, tag = 'smem constant byte address 0x4 - core index']
  #allocation1 [shape = 'u32[144,128]{1,0:T(1,128)}', space=vmem, size = 0x12000, scoped, tag = 'internal scratch']
  #allocation2 [shape = 'f32[2,256]{1,0:T(2,128)}', space=vmem, size = 0x800, scoped, tag = 'scratch operand']
  %s0 = inlined_call_operand.hbm [shape: bf16[2,4,256], index: 0, kind: input, shape index: {}]
  %s1 = inlined_call_operand.vmem [shape: bf16[2,4], index: 1, kind: input, shape index: {}]
  %s2 = inlined_call_operand.vmem [shape: f32[2,1], index: 2, kind: input, shape index: {}]
  %s3 = inlined_call_operand.hbm [shape: bf16[128,512], index: 3, kind: input, shape index: {}]
  %s4 = inlined_call_operand.hbm [shape: f32[2,2,1024], index: 4, kind: output, shape index: {}]
  %s5 = sld [smem:[#allocation0]]
  $region57: #{tpu_custom_call.1} parent=0
    _
  %s7 = ssub.s32 1, %s5
  %s8 = scalar_select 0, %s7, %s5
  $region1: #{tpu_custom_call.1} parent=0
    #allocation3 [shape = 'u8[4096]{0}', space=vmem, size = 0x1000, scoped, tag = 'input window, operand 0']
    #allocation4 [shape = 's32[2]{0}', space=sflag, size = 0x8, scoped, tag = 'scoped memory for tpu_custom_call.1']
    #allocation5 [shape = 's32[2]{0}', space=sflag, size = 0x8, scoped, tag = 'scoped memory for tpu_custom_call.1']
    #allocation6 [shape = 'u8[131072]{0}', space=vmem, size = 0x20000, scoped, tag = 'input window, operand 3, single buffered']
    #allocation7 [shape = 's32[1]{0}', space=sflag, size = 0x4, scoped, tag = 'scoped memory for tpu_custom_call.1']
    #allocation8 [shape = 'u8[16384]{0}', space=vmem, size = 0x4000, scoped, tag = 'output window, operand 0']
    %9 = vsyncpa [#allocation4], 0
    %s10 = scalar_lea.sflag [#allocation4], 1
    %11 = vsyncpa %s10, 0
    %12 = vsyncpa [#allocation7], 0
    %13 = vsyncpa [#allocation5], 0
    %s14 = scalar_lea.sflag [#allocation5], 1
    %15 = vsyncpa %s14, 0
    loop: start=0, step=1, limit=4
    $region2: #{tpu_custom_call.1} parent=1 // loop_pre_header
      _
    $region3: #{tpu_custom_call.1} parent=1 // loop_header
      %s17 = sphi 0, %s21
      %p18 = scmp.ge.s32.totalorder %s17, 4
      %s24 = sphi 0, %s36
      %s25 = sphi 0, %s32
      %s26 = sphi 0, %s24
      %s27 = sphi 0, %s25
      %s28 = sphi 0, %s26
      %s29 = sphi 0, %s27
      %s41 = sphi 0, %s43
      %s44 = sphi 0, %s41
      %s45 = sphi 0, %s44
      %s61 = sphi 0, %s45
      %s65 = sphi 0, %s65
      %s67 = sphi 0, %s65
      %s68 = sphi 0, %s67
      %s82 = sphi 0, %s68
      %s86 = sphi 0, %s86
      %s88 = sphi 0, %s86
      %s89 = sphi 0, %s88
      %s103 = sphi 0, %s89
      %s107 = sphi 0, %s107
      %s109 = sphi 0, %s107
      %s110 = sphi 0, %s109
      %s124 = sphi 0, %s110
      %s132 = sphi 0, %s134
      %s135 = sphi 0, %s132
      %s136 = sphi 0, %s135
      %s152 = sphi 0, %s136
    $region4: #{tpu_custom_call.1} parent=1 // loop_header_branch
      %20 = sbr.rel (%p18) target = $region8
    $region5: #{tpu_custom_call.1} parent=1 // loop_body
      %s22 = ssub.s32 %s17, 1
      %s23 = ssub.s32 %s17, 2
      %s30 = sadd.s32 1, %s25
      %p31 = scmp.ge.s32.totalorder %s30, 1
      %s32 = scalar_select %p31, 0, %s30
      %s33 = sadd.s32 1, %s24
      %s34 = scalar_select %p31, %s33, %s24
      %p35 = scmp.ge.s32.totalorder %s34, 2
      %s36 = scalar_select %p35, 0, %s34
      %s37 = ssub.s32 %s24, %s36
      %s38 = ssub.s32 %s25, %s32
      %s39 = sor.u32 %s37, %s38
      %p40 = scmp.eq.s32.totalorder %s39, 0
      %s42 = sadd.s32 %s41, 1
      %s43 = scalar_select %p40, %s41, %s42
      %p46 = pneg %p40
      %p47 = scmp.eq.s32.totalorder %s17, 1
      %p48 = por %p46, %p47
      %p49 = scmp.ne.s32.totalorder %s41, %s44
      %p50 = scmp.eq.s32.totalorder %s17, 0
      %p51 = por %p49, %p50
      %p52 = scmp.ne.s32.totalorder %s41, %s44
      %p53 = scmp.eq.s32.totalorder %s22, 1
      %p54 = por %p52, %p53
      %p55 = scmp.ne.s32.totalorder %s44, %s45
      %p56 = scmp.eq.s32.totalorder %s22, 0
      %p57 = por %p55, %p56
      %p58 = scmp.ne.s32.totalorder %s44, %s45
      %p59 = scmp.eq.s32.totalorder %s23, 1
      %p60 = por %p58, %p59
      %p62 = scmp.ne.s32.totalorder %s45, %s61
      %p63 = scmp.eq.s32.totalorder %s23, 0
      %p64 = por %p62, %p63
      %s66 = sadd.s32 %s65, 1
      %p69 = scmp.eq.s32.totalorder %s17, 1
      %p70 = scmp.ne.s32.totalorder %s65, %s67
      %p71 = scmp.eq.s32.totalorder %s17, 0
      %p72 = por %p70, %p71
      %p73 = scmp.ne.s32.totalorder %s65, %s67
      %p74 = scmp.eq.s32.totalorder %s22, 1
      %p75 = por %p73, %p74
      %p76 = scmp.ne.s32.totalorder %s67, %s68
      %p77 = scmp.eq.s32.totalorder %s22, 0
      %p78 = por %p76, %p77
      %p79 = scmp.ne.s32.totalorder %s67, %s68
      %p80 = scmp.eq.s32.totalorder %s23, 1
      %p81 = por %p79, %p80
      %p83 = scmp.ne.s32.totalorder %s68, %s82
      %p84 = scmp.eq.s32.totalorder %s23, 0
      %p85 = por %p83, %p84
      %s87 = sadd.s32 %s86, 1
      %p90 = scmp.eq.s32.totalorder %s17, 1
      %p91 = scmp.ne.s32.totalorder %s86, %s88
      %p92 = scmp.eq.s32.totalorder %s17, 0
      %p93 = por %p91, %p92
      %p94 = scmp.ne.s32.totalorder %s86, %s88
      %p95 = scmp.eq.s32.totalorder %s22, 1
      %p96 = por %p94, %p95
      %p97 = scmp.ne.s32.totalorder %s88, %s89
      %p98 = scmp.eq.s32.totalorder %s22, 0
      %p99 = por %p97, %p98
      %p100 = scmp.ne.s32.totalorder %s88, %s89
      %p101 = scmp.eq.s32.totalorder %s23, 1
      %p102 = por %p100, %p101
      %p104 = scmp.ne.s32.totalorder %s89, %s103
      %p105 = scmp.eq.s32.totalorder %s23, 0
      %p106 = por %p104, %p105
      %s108 = sadd.s32 %s107, 1
      %p111 = scmp.eq.s32.totalorder %s17, 1
      %p112 = scmp.ne.s32.totalorder %s107, %s109
      %p113 = scmp.eq.s32.totalorder %s17, 0
      %p114 = por %p112, %p113
      %p115 = scmp.ne.s32.totalorder %s107, %s109
      %p116 = scmp.eq.s32.totalorder %s22, 1
      %p117 = por %p115, %p116
      %p118 = scmp.ne.s32.totalorder %s109, %s110
      %p119 = scmp.eq.s32.totalorder %s22, 0
      %p120 = por %p118, %p119
      %p121 = scmp.ne.s32.totalorder %s109, %s110
      %p122 = scmp.eq.s32.totalorder %s23, 1
      %p123 = por %p121, %p122
      %p125 = scmp.ne.s32.totalorder %s110, %s124
      %p126 = scmp.eq.s32.totalorder %s23, 0
      %p127 = por %p125, %p126
      %s128 = ssub.s32 %s24, %s36
      %s129 = ssub.s32 %s25, %s32
      %s130 = sor.u32 %s128, %s129
      %p131 = scmp.eq.s32.totalorder %s130, 0
      %s133 = sadd.s32 %s132, 1
      %s134 = scalar_select %p131, %s132, %s133
      %p137 = pneg %p131
      %p138 = scmp.eq.s32.totalorder %s17, 1
      %p139 = por %p137, %p138
      %p140 = scmp.ne.s32.totalorder %s132, %s135
      %p141 = scmp.eq.s32.totalorder %s17, 0
      %p142 = por %p140, %p141
      %p143 = scmp.ne.s32.totalorder %s132, %s135
      %p144 = scmp.eq.s32.totalorder %s22, 1
      %p145 = por %p143, %p144
      %p146 = scmp.ne.s32.totalorder %s135, %s136
      %p147 = scmp.eq.s32.totalorder %s22, 0
      %p148 = por %p146, %p147
      %p149 = scmp.ne.s32.totalorder %s135, %s136
      %p150 = scmp.eq.s32.totalorder %s23, 1
      %p151 = por %p149, %p150
      %p153 = scmp.ne.s32.totalorder %s136, %s152
      %p154 = scmp.eq.s32.totalorder %s23, 0
      %p155 = por %p153, %p154
      %p156 = scmp.le.s32.totalorder 1, %s17
      %p157 = scmp.lt.s32.totalorder %s17, 3
      %p158 = pnand %p156, %p157
      %p159 = pneg %p158
      // Predicated region
      $region9: #{tpu_custom_call.1} parent=5 // pred_check
        _
      $region10: #{tpu_custom_call.1} parent=5 // pred_check_branch
        %161 = sbr.rel (%p158) target = $region12
      $region11: #{tpu_custom_call.1} parent=5 // pred_region
        %s162 = ssub.s32 %s17, 1
        // Predicated region
        $region13: #{tpu_custom_call.1} parent=11 // pred_check
          %p163 = pneg %p78
        $region14: #{tpu_custom_call.1} parent=11 // pred_check_branch
          %165 = sbr.rel (%p163) target = $region16
        $region15: #{tpu_custom_call.1} parent=11 // pred_region
          _
        $region16: #{tpu_custom_call.1} parent=11 // pred_fallthru
          _
        // Predicated region
        $region17: #{tpu_custom_call.1} parent=11 // pred_check
          %p166 = pneg %p99
        $region18: #{tpu_custom_call.1} parent=11 // pred_check_branch
          %168 = sbr.rel (%p166) target = $region20
        $region19: #{tpu_custom_call.1} parent=11 // pred_region
          _
        $region20: #{tpu_custom_call.1} parent=11 // pred_fallthru
          _
        // Predicated region
        $region21: #{tpu_custom_call.1} parent=11 // pred_check
          %p169 = pneg %p120
        $region22: #{tpu_custom_call.1} parent=11 // pred_check_branch
          %171 = sbr.rel (%p169) target = $region24
        $region23: #{tpu_custom_call.1} parent=11 // pred_region
          %s173 = ssub.s32 4096, 4096
          %174 = vsyncadd [#allocation7], %s173
          %s175 = sshll.u32 [#allocation6], 4
          %s176 = int_to_ptr.vmem [resolvable:$true] %s175
          %181 = dma.hbm_to_vmem [thread:$0]  %s3, 4096, %s176, [#allocation7], 256, 256, 16
        $region24: #{tpu_custom_call.1} parent=11 // pred_fallthru
          _
      $region12: #{tpu_custom_call.1} parent=5 // pred_fallthru
        _
      %p182 = scmp.lt.s32.totalorder %s17, 2
      // Predicated region
      $region25: #{tpu_custom_call.1} parent=5 // pred_check
        %p183 = pneg %p182
      $region26: #{tpu_custom_call.1} parent=5 // pred_check_branch
        %185 = sbr.rel (%p183) target = $region28
      $region27: #{tpu_custom_call.1} parent=5 // pred_region
        // Predicated region
        $region29: #{tpu_custom_call.1} parent=27 // pred_check
          %p186 = pneg %p51
        $region30: #{tpu_custom_call.1} parent=27 // pred_check_branch
          %188 = sbr.rel (%p186) target = $region32
        $region31: #{tpu_custom_call.1} parent=27 // pred_region
          %s189 = sand.u32 %s41, 1
          %s190 = scalar_lea.sflag [#allocation4], %s189
          %s191 = sand.u32 %s41, 1
          %s192 = smul.addr %s191, 4
          %s193 = scalar_lea.vmem [#allocation3], %s192
          %s194 = smul.u32 2, %s25
          %s196 = ssub.s32 64, 64
          %197 = vsyncadd %s190, %s196
          %s198 = smul.addr %s24, 2
          %s199 = sadd.s32 %s194, %s198
          %s200 = smul.addr %s199, 32
          %s201 = scalar_lea.hbm %s0, %s200
          %s203 = sshll.u32 %s193, 4
          %s204 = int_to_ptr.vmem [resolvable:$true] %s203
          %206 = dma.hbm_to_vmem [thread:$0]  %s201, 64, %s204, %s190
        $region32: #{tpu_custom_call.1} parent=27 // pred_fallthru
          _
      $region28: #{tpu_custom_call.1} parent=5 // pred_fallthru
        _
      %p207 = scmp.le.s32.totalorder 1, %s17
      %p208 = scmp.lt.s32.totalorder %s17, 3
      %p209 = pnand %p207, %p208
      %p210 = pneg %p209
      // Predicated region
      $region33: #{tpu_custom_call.1} parent=5 // pred_check
        _
      $region34: #{tpu_custom_call.1} parent=5 // pred_check_branch
        %212 = sbr.rel (%p209) target = $region36
      $region35: #{tpu_custom_call.1} parent=5 // pred_region
        %s213 = ssub.s32 %s17, 1
        %s214 = sand.u32 %s44, 1
        %s215 = scalar_lea.sflag [#allocation4], %s214
        %s216 = sand.u32 %s44, 1
        %s217 = smul.addr %s216, 4
        %s218 = scalar_lea.vmem [#allocation3], %s217
        // Predicated region
        $region37: #{tpu_custom_call.1} parent=35 // pred_check
          %p219 = pneg %p57
        $region38: #{tpu_custom_call.1} parent=35 // pred_check_branch
          %221 = sbr.rel (%p219) target = $region40
        $region39: #{tpu_custom_call.1} parent=35 // pred_region
          %222 = dma.done %s215, 64
        $region40: #{tpu_custom_call.1} parent=35 // pred_fallthru
          _
        // Predicated region
        $region41: #{tpu_custom_call.1} parent=35 // pred_check
          %p223 = pneg %p120
        $region42: #{tpu_custom_call.1} parent=35 // pred_check_branch
          %225 = sbr.rel (%p223) target = $region44
        $region43: #{tpu_custom_call.1} parent=35 // pred_region
          %226 = dma.done [#allocation7], 4096
        $region44: #{tpu_custom_call.1} parent=35 // pred_fallthru
          _
        %s227 = sand.u32 %s44, 1
        %s228 = scalar_lea.sflag [#allocation4], %s227
        %s229 = sand.u32 %s44, 1
        %s230 = smul.addr %s229, 4
        %s231 = scalar_lea.vmem [#allocation3], %s230
        %p232 = pneg %p57
        %p233 = pneg %p54
        %p234 = pneg %p78
        %p235 = pneg %p75
        %p236 = pneg %p99
        %p237 = pneg %p96
        %p238 = pneg %p120
        %p239 = pneg %p117
        %p240 = pneg %p148
        %p241 = pneg %p145
        %s242 = sand.u32 %s135, 1
        %s243 = scalar_lea.sflag [#allocation5], %s242
        %s244 = sand.u32 %s135, 1
        %s245 = smul.addr %s244, 16
        %s246 = scalar_lea.vmem [#allocation8], %s245
        %s247 = smul.u32 2, %s27
        %s248 = smul.u32 8, %s27
        %v250 = vld [vmem:[%s1] sm:$0x1]
        %v251 = vld [vmem:[%s218] sm:$0xf]
        %v252 = vld [vmem:[%s2] sm:$0x3]
        %254 = vset.pattern.permute.xlu0 0
        %255 = vperm.xlu0 %254, %v252
        %v256 = vpop.permute.xlu0 %255
        %v260 = vunpack.c.l.s4 1983009808
        %v261 = vunpack.c.0.s8 %v260
        %v262 = vlaneseq
        %v263 = vshrl.u32 %v262, 7
        %v264 = vsub.s32 %v261, %v263
        %v265 = vrot.slane %v251, %v264
        %v266 = vcombine.high %v265, %v265
        %vm267 = vcmask 31744
        %v269 = vsel %vm267, %v250, 0
        %vm271 = vcmask 1041408
        %v273 = vsel %vm271, %v265, 0
        %v276 = vsel %vm271, %v266, 0
        %278 = vmatprep.subr.bf16.mxu0 0
        %279 = vmatpush1.bf16.msra.mxu0 0
        %280 = vmatprep.subr.bf16.mxu0 0
        %281 = vmatpush1.bf16.msra.mxu0 0
        %282 = vmatprep.subr.bf16.mxu0 0
        %283 = vmatpush1.bf16.msra.mxu0 0
        %284 = vmatprep.subr.bf16.mxu0 0
        %285 = vmatpush1.bf16.msra.mxu0 0
        %286 = vmatprep.subr.bf16.mxu0 0
        %287 = vmatpush1.bf16.msra.mxu0 0
        %288 = vmatprep.subr.bf16.mxu0 0
        %289 = vmatpush1.bf16.msra.mxu0 0
        %290 = vmatprep.subr.bf16.mxu0 0
        %291 = vmatpush1.bf16.msra.mxu0 0
        %292 = vmatprep.subr.bf16.mxu0 %v276
        %293 = vmatpush1.bf16.msra.mxu0 %v273
        %294 = vmatprep.subr.bf16.mxu0 0
        %295 = vmatpush2.bf16.msra.mxu0 0
        %296 = vmatprep.subr.bf16.mxu0 0
        %297 = vmatpush2.bf16.msra.mxu0 0
        %298 = vmatprep.subr.bf16.mxu0 0
        %299 = vmatpush2.bf16.msra.mxu0 0
        %300 = vmatprep.subr.bf16.mxu0 0
        %301 = vmatpush2.bf16.msra.mxu0 0
        %302 = vmatprep.subr.bf16.mxu0 0
        %303 = vmatpush2.bf16.msra.mxu0 0
        %304 = vmatprep.subr.bf16.mxu0 0
        %305 = vmatpush2.bf16.msra.mxu0 0
        %306 = vmatprep.subr.bf16.mxu0 0
        %307 = vmatpush2.bf16.msra.mxu0 0
        %308 = vmatprep.subr.bf16.mxu0 0
        %309 = vmatpush2.bf16.msra.mxu0 0
        %310 = vmatprep.mubr.bf16.mxu0 0
        %311 = vmatmul.mubr.bf16.gmra.mxu0 %v269
        %v312 = vpop.f32.mrf.mxu0
        %v313 = vadd.f32 %v256, %v312
        %v314 = vpop.f32.mrf.mxu0
        %v315 = vadd.f32 %v256, %v314
        %v316 = vpop.f32.mrf.mxu0
        %v317 = vpop.f32.mrf.mxu0
        %318 = vdwg.mxu0
        %v319 = vmax.f32 %v313, 0.0
        %v320 = vmax.f32 %v315, 0.0
        %v323 = vcombine.low %v319, %v320
        %v325 = vunpack.c.l.s4 1983009808
        %v326 = vunpack.c.0.s8 %v325
        %v327 = vlaneseq
        %v328 = vshrl.u32 %v327, 7
        %v329 = vsub.s32 %v326, %v328
        %v330 = vrot.slane %v323, %v329
        %332 = vst [vmem:[#allocation2] sm:$0xf] %v330
        %v333 = vld [vmem:[#allocation2] sm:$0x3]
        %v334 = vpack.c.bf16 %v333, %v333
        %v335 = vld [vmem:[#allocation6] sm:$0xff]
        %v336 = vld [vmem:[#allocation6 + $0x8] sm:$0xff]
        %v337 = vld [vmem:[#allocation6 + $0x10] sm:$0xff]
        %v338 = vld [vmem:[#allocation6 + $0x18] sm:$0xff]
        %v339 = vld [vmem:[#allocation6 + $0x20] sm:$0xff]
        %v340 = vld [vmem:[#allocation6 + $0x28] sm:$0xff]
        %v341 = vld [vmem:[#allocation6 + $0x30] sm:$0xff]
        %v342 = vld [vmem:[#allocation6 + $0x38] sm:$0xff]
        %v343 = vld [vmem:[#allocation6 + $0x40] sm:$0xff]
        %v344 = vld [vmem:[#allocation6 + $0x48] sm:$0xff]
        %v345 = vld [vmem:[#allocation6 + $0x50] sm:$0xff]
        %v346 = vld [vmem:[#allocation6 + $0x58] sm:$0xff]
        %v347 = vld [vmem:[#allocation6 + $0x60] sm:$0xff]
        %v348 = vld [vmem:[#allocation6 + $0x68] sm:$0xff]
        %v349 = vld [vmem:[#allocation6 + $0x70] sm:$0xff]
        %v350 = vld [vmem:[#allocation6 + $0x78] sm:$0xff]
        %v351 = vld [vmem:[#allocation6 + $0x80] sm:$0xff]
        %v352 = vld [vmem:[#allocation6 + $0x88] sm:$0xff]
        %v353 = vld [vmem:[#allocation6 + $0x90] sm:$0xff]
        %v354 = vld [vmem:[#allocation6 + $0x98] sm:$0xff]
        %v355 = vld [vmem:[#allocation6 + $0xa0] sm:$0xff]
        %v356 = vld [vmem:[#allocation6 + $0xa8] sm:$0xff]
        %v357 = vld [vmem:[#allocation6 + $0xb0] sm:$0xff]
        %v358 = vld [vmem:[#allocation6 + $0xb8] sm:$0xff]
        %v359 = vld [vmem:[#allocation6 + $0xc0] sm:$0xff]
        %v360 = vld [vmem:[#allocation6 + $0xc8] sm:$0xff]
        %v361 = vld [vmem:[#allocation6 + $0xd0] sm:$0xff]
        %v362 = vld [vmem:[#allocation6 + $0xd8] sm:$0xff]
        %v363 = vld [vmem:[#allocation6 + $0xe0] sm:$0xff]
        %v364 = vld [vmem:[#allocation6 + $0xe8] sm:$0xff]
        %v365 = vld [vmem:[#allocation6 + $0xf0] sm:$0xff]
        %v366 = vld [vmem:[#allocation6 + $0xf8] sm:$0xff]
        %v399 = vunpack.c.l.b16 %v335
        %v400 = vunpack.c.h.b16 %v335
        %v401 = vunpack.c.l.b16 %v336
        %v402 = vunpack.c.h.b16 %v336
        %v403 = vunpack.c.l.b16 %v337
        %v404 = vunpack.c.h.b16 %v337
        %v405 = vunpack.c.l.b16 %v338
        %v406 = vunpack.c.h.b16 %v338
        %v407 = vunpack.c.l.b16 %v339
        %v408 = vunpack.c.h.b16 %v339
        %v409 = vunpack.c.l.b16 %v340
        %v410 = vunpack.c.h.b16 %v340
        %v411 = vunpack.c.l.b16 %v341
        %v412 = vunpack.c.h.b16 %v341
        %v413 = vunpack.c.l.b16 %v342
        %v414 = vunpack.c.h.b16 %v342
        %v415 = vunpack.c.l.b16 %v343
        %v416 = vunpack.c.h.b16 %v343
        %v417 = vunpack.c.l.b16 %v344
        %v418 = vunpack.c.h.b16 %v344
        %v419 = vunpack.c.l.b16 %v345
        %v420 = vunpack.c.h.b16 %v345
        %v421 = vunpack.c.l.b16 %v346
        %v422 = vunpack.c.h.b16 %v346
        %v423 = vunpack.c.l.b16 %v347
        %v424 = vunpack.c.h.b16 %v347
        %v425 = vunpack.c.l.b16 %v348
        %v426 = vunpack.c.h.b16 %v348
        %v427 = vunpack.c.l.b16 %v349
        %v428 = vunpack.c.h.b16 %v349
        %v429 = vunpack.c.l.b16 %v350
        %v430 = vunpack.c.h.b16 %v350
        %v431 = vunpack.c.l.b16 %v351
        %v432 = vunpack.c.h.b16 %v351
        %v433 = vunpack.c.l.b16 %v352
        %v434 = vunpack.c.h.b16 %v352
        %v435 = vunpack.c.l.b16 %v353
        %v436 = vunpack.c.h.b16 %v353
        %v437 = vunpack.c.l.b16 %v354
        %v438 = vunpack.c.h.b16 %v354
        %v439 = vunpack.c.l.b16 %v355
        %v440 = vunpack.c.h.b16 %v355
        %v441 = vunpack.c.l.b16 %v356
        %v442 = vunpack.c.h.b16 %v356
        %v443 = vunpack.c.l.b16 %v357
        %v444 = vunpack.c.h.b16 %v357
        %v445 = vunpack.c.l.b16 %v358
        %v446 = vunpack.c.h.b16 %v358
        %v447 = vunpack.c.l.b16 %v359
        %v448 = vunpack.c.h.b16 %v359
        %v449 = vunpack.c.l.b16 %v360
        %v450 = vunpack.c.h.b16 %v360
        %v451 = vunpack.c.l.b16 %v361
        %v452 = vunpack.c.h.b16 %v361
        %v453 = vunpack.c.l.b16 %v362
        %v454 = vunpack.c.h.b16 %v362
        %v455 = vunpack.c.l.b16 %v363
        %v456 = vunpack.c.h.b16 %v363
        %v457 = vunpack.c.l.b16 %v364
        %v458 = vunpack.c.h.b16 %v364
        %v459 = vunpack.c.l.b16 %v365
        %v460 = vunpack.c.h.b16 %v365
        %v461 = vunpack.c.l.b16 %v366
        %v462 = vunpack.c.h.b16 %v366
        %v463 = vpack.c.b16 %v403, %v399
        %v464 = vpack.c.b16 %v404, %v400
        %v465 = vpack.c.b16 %v405, %v401
        %v466 = vpack.c.b16 %v406, %v402
        %v467 = vpack.c.b16 %v411, %v407
        %v468 = vpack.c.b16 %v412, %v408
        %v469 = vpack.c.b16 %v413, %v409
        %v470 = vpack.c.b16 %v414, %v410
        %v471 = vpack.c.b16 %v419, %v415
        %v472 = vpack.c.b16 %v420, %v416
        %v473 = vpack.c.b16 %v421, %v417
        %v474 = vpack.c.b16 %v422, %v418
        %v475 = vpack.c.b16 %v427, %v423
        %v476 = vpack.c.b16 %v428, %v424
        %v477 = vpack.c.b16 %v429, %v425
        %v478 = vpack.c.b16 %v430, %v426
        %v479 = vpack.c.b16 %v435, %v431
        %v480 = vpack.c.b16 %v436, %v432
        %v481 = vpack.c.b16 %v437, %v433
        %v482 = vpack.c.b16 %v438, %v434
        %v483 = vpack.c.b16 %v443, %v439
        %v484 = vpack.c.b16 %v444, %v440
        %v485 = vpack.c.b16 %v445, %v441
        %v486 = vpack.c.b16 %v446, %v442
        %v487 = vpack.c.b16 %v451, %v447
        %v488 = vpack.c.b16 %v452, %v448
        %v489 = vpack.c.b16 %v453, %v449
        %v490 = vpack.c.b16 %v454, %v450
        %v491 = vpack.c.b16 %v459, %v455
        %v492 = vpack.c.b16 %v460, %v456
        %v493 = vpack.c.b16 %v461, %v457
        %v494 = vpack.c.b16 %v462, %v458
        %527 = vmatprep.subr.bf16.mxu0 %v492
        %528 = vmatpush1.bf16.msra.mxu0 %v491
        %529 = vmatprep.subr.bf16.mxu0 %v488
        %530 = vmatpush1.bf16.msra.mxu0 %v487
        %531 = vmatprep.subr.bf16.mxu0 %v484
        %532 = vmatpush1.bf16.msra.mxu0 %v483
        %533 = vmatprep.subr.bf16.mxu0 %v480
        %534 = vmatpush1.bf16.msra.mxu0 %v479
        %535 = vmatprep.subr.bf16.mxu0 %v476
        %536 = vmatpush1.bf16.msra.mxu0 %v475
        %537 = vmatprep.subr.bf16.mxu0 %v472
        %538 = vmatpush1.bf16.msra.mxu0 %v471
        %539 = vmatprep.subr.bf16.mxu0 %v468
        %540 = vmatpush1.bf16.msra.mxu0 %v467
        %541 = vmatprep.subr.bf16.mxu0 %v464
        %542 = vmatpush1.bf16.msra.mxu0 %v463
        %543 = vmatprep.subr.bf16.mxu0 0
        %544 = vmatpush2.bf16.msra.mxu0 0
        %545 = vmatprep.subr.bf16.mxu0 0
        %546 = vmatpush2.bf16.msra.mxu0 0
        %547 = vmatprep.subr.bf16.mxu0 0
        %548 = vmatpush2.bf16.msra.mxu0 0
        %549 = vmatprep.subr.bf16.mxu0 0
        %550 = vmatpush2.bf16.msra.mxu0 0
        %551 = vmatprep.subr.bf16.mxu0 0
        %552 = vmatpush2.bf16.msra.mxu0 0
        %553 = vmatprep.subr.bf16.mxu0 0
        %554 = vmatpush2.bf16.msra.mxu0 0
        %555 = vmatprep.subr.bf16.mxu0 0
        %556 = vmatpush2.bf16.msra.mxu0 0
        %557 = vmatprep.subr.bf16.mxu0 0
        %558 = vmatpush2.bf16.msra.mxu0 0
        %559 = vmatprep.mubr.bf16.mxu0 0
        %560 = vmatmul.mubr.bf16.gmra.mxu0 %v334
        %v561 = vpop.f32.mrf.mxu0
        %v562 = vadd.f32 0.0, %v561
        %v563 = vpop.f32.mrf.mxu0
        %v564 = vadd.f32 0.0, %v563
        %v565 = vpop.f32.mrf.mxu0
        %v566 = vpop.f32.mrf.mxu0
        %567 = vdwg.mxu0
        %568 = vmatprep.subr.bf16.mxu0 %v494
        %569 = vmatpush1.bf16.msra.mxu0 %v493
        %570 = vmatprep.subr.bf16.mxu0 %v490
        %571 = vmatpush1.bf16.msra.mxu0 %v489
        %572 = vmatprep.subr.bf16.mxu0 %v486
        %573 = vmatpush1.bf16.msra.mxu0 %v485
        %574 = vmatprep.subr.bf16.mxu0 %v482
        %575 = vmatpush1.bf16.msra.mxu0 %v481
        %576 = vmatprep.subr.bf16.mxu0 %v478
        %577 = vmatpush1.bf16.msra.mxu0 %v477
        %578 = vmatprep.subr.bf16.mxu0 %v474
        %579 = vmatpush1.bf16.msra.mxu0 %v473
        %580 = vmatprep.subr.bf16.mxu0 %v470
        %581 = vmatpush1.bf16.msra.mxu0 %v469
        %582 = vmatprep.subr.bf16.mxu0 %v466
        %583 = vmatpush1.bf16.msra.mxu0 %v465
        %584 = vmatprep.subr.bf16.mxu0 0
        %585 = vmatpush2.bf16.msra.mxu0 0
        %586 = vmatprep.subr.bf16.mxu0 0
        %587 = vmatpush2.bf16.msra.mxu0 0
        %588 = vmatprep.subr.bf16.mxu0 0
        %589 = vmatpush2.bf16.msra.mxu0 0
        %590 = vmatprep.subr.bf16.mxu0 0
        %591 = vmatpush2.bf16.msra.mxu0 0
        %592 = vmatprep.subr.bf16.mxu0 0
        %593 = vmatpush2.bf16.msra.mxu0 0
        %594 = vmatprep.subr.bf16.mxu0 0
        %595 = vmatpush2.bf16.msra.mxu0 0
        %596 = vmatprep.subr.bf16.mxu0 0
        %597 = vmatpush2.bf16.msra.mxu0 0
        %598 = vmatprep.subr.bf16.mxu0 0
        %599 = vmatpush2.bf16.msra.mxu0 0
        %600 = vmatprep.mubr.bf16.mxu0 0
        %601 = vmatmul.mubr.bf16.gmra.mxu0 %v334
        %v602 = vpop.f32.mrf.mxu0
        %v603 = vadd.f32 0.0, %v602
        %v604 = vpop.f32.mrf.mxu0
        %v605 = vadd.f32 0.0, %v604
        %v606 = vpop.f32.mrf.mxu0
        %v607 = vpop.f32.mrf.mxu0
        %608 = vdwg.mxu0
        %v613 = vcombine.low %v562, %v564
        %v614 = vcombine.low %v603, %v605
        %v616 = vunpack.c.l.s4 1983009808
        %v617 = vunpack.c.0.s8 %v616
        %v618 = vlaneseq
        %v619 = vshrl.u32 %v618, 7
        %v620 = vsub.s32 %v617, %v619
        %v621 = vrot.slane %v613, %v620
        %v623 = vunpack.c.l.s4 1983009808
        %v624 = vunpack.c.0.s8 %v623
        %v625 = vlaneseq
        %v626 = vshrl.u32 %v625, 7
        %v627 = vsub.s32 %v624, %v626
        %v628 = vrot.slane %v614, %v627
        %v629 = vcombine.low %v621, %v628
        %631 = vst [vmem:[%s246] sm:$0xff] %v629
        %v632 = vld [vmem:[#allocation2 + $0x2] sm:$0x3]
        %v633 = vpack.c.bf16 %v632, %v632
        %v634 = vld [vmem:[#allocation6] sm:$0xff]
        %v635 = vld [vmem:[#allocation6 + $0x8] sm:$0xff]
        %v636 = vld [vmem:[#allocation6 + $0x10] sm:$0xff]
        %v637 = vld [vmem:[#allocation6 + $0x18] sm:$0xff]
        %v638 = vld [vmem:[#allocation6 + $0x20] sm:$0xff]
        %v639 = vld [vmem:[#allocation6 + $0x28] sm:$0xff]
        %v640 = vld [vmem:[#allocation6 + $0x30] sm:$0xff]
        %v641 = vld [vmem:[#allocation6 + $0x38] sm:$0xff]
        %v642 = vld [vmem:[#allocation6 + $0x40] sm:$0xff]
        %v643 = vld [vmem:[#allocation6 + $0x48] sm:$0xff]
        %v644 = vld [vmem:[#allocation6 + $0x50] sm:$0xff]
        %v645 = vld [vmem:[#allocation6 + $0x58] sm:$0xff]
        %v646 = vld [vmem:[#allocation6 + $0x60] sm:$0xff]
        %v647 = vld [vmem:[#allocation6 + $0x68] sm:$0xff]
        %v648 = vld [vmem:[#allocation6 + $0x70] sm:$0xff]
        %v649 = vld [vmem:[#allocation6 + $0x78] sm:$0xff]
        %v650 = vld [vmem:[#allocation6 + $0x80] sm:$0xff]
        %v651 = vld [vmem:[#allocation6 + $0x88] sm:$0xff]
        %v652 = vld [vmem:[#allocation6 + $0x90] sm:$0xff]
        %v653 = vld [vmem:[#allocation6 + $0x98] sm:$0xff]
        %v654 = vld [vmem:[#allocation6 + $0xa0] sm:$0xff]
        %v655 = vld [vmem:[#allocation6 + $0xa8] sm:$0xff]
        %v656 = vld [vmem:[#allocation6 + $0xb0] sm:$0xff]
        %v657 = vld [vmem:[#allocation6 + $0xb8] sm:$0xff]
        %v658 = vld [vmem:[#allocation6 + $0xc0] sm:$0xff]
        %v659 = vld [vmem:[#allocation6 + $0xc8] sm:$0xff]
        %v660 = vld [vmem:[#allocation6 + $0xd0] sm:$0xff]
        %v661 = vld [vmem:[#allocation6 + $0xd8] sm:$0xff]
        %v662 = vld [vmem:[#allocation6 + $0xe0] sm:$0xff]
        %v663 = vld [vmem:[#allocation6 + $0xe8] sm:$0xff]
        %v664 = vld [vmem:[#allocation6 + $0xf0] sm:$0xff]
        %v665 = vld [vmem:[#allocation6 + $0xf8] sm:$0xff]
        %v698 = vunpack.c.l.b16 %v634
        %v699 = vunpack.c.h.b16 %v634
        %v700 = vunpack.c.l.b16 %v635
        %v701 = vunpack.c.h.b16 %v635
        %v702 = vunpack.c.l.b16 %v636
        %v703 = vunpack.c.h.b16 %v636
        %v704 = vunpack.c.l.b16 %v637
        %v705 = vunpack.c.h.b16 %v637
        %v706 = vunpack.c.l.b16 %v638
        %v707 = vunpack.c.h.b16 %v638
        %v708 = vunpack.c.l.b16 %v639
        %v709 = vunpack.c.h.b16 %v639
        %v710 = vunpack.c.l.b16 %v640
        %v711 = vunpack.c.h.b16 %v640
        %v712 = vunpack.c.l.b16 %v641
        %v713 = vunpack.c.h.b16 %v641
        %v714 = vunpack.c.l.b16 %v642
        %v715 = vunpack.c.h.b16 %v642
        %v716 = vunpack.c.l.b16 %v643
        %v717 = vunpack.c.h.b16 %v643
        %v718 = vunpack.c.l.b16 %v644
        %v719 = vunpack.c.h.b16 %v644
        %v720 = vunpack.c.l.b16 %v645
        %v721 = vunpack.c.h.b16 %v645
        %v722 = vunpack.c.l.b16 %v646
        %v723 = vunpack.c.h.b16 %v646
        %v724 = vunpack.c.l.b16 %v647
        %v725 = vunpack.c.h.b16 %v647
        %v726 = vunpack.c.l.b16 %v648
        %v727 = vunpack.c.h.b16 %v648
        %v728 = vunpack.c.l.b16 %v649
        %v729 = vunpack.c.h.b16 %v649
        %v730 = vunpack.c.l.b16 %v650
        %v731 = vunpack.c.h.b16 %v650
        %v732 = vunpack.c.l.b16 %v651
        %v733 = vunpack.c.h.b16 %v651
        %v734 = vunpack.c.l.b16 %v652
        %v735 = vunpack.c.h.b16 %v652
        %v736 = vunpack.c.l.b16 %v653
        %v737 = vunpack.c.h.b16 %v653
        %v738 = vunpack.c.l.b16 %v654
        %v739 = vunpack.c.h.b16 %v654
        %v740 = vunpack.c.l.b16 %v655
        %v741 = vunpack.c.h.b16 %v655
        %v742 = vunpack.c.l.b16 %v656
        %v743 = vunpack.c.h.b16 %v656
        %v744 = vunpack.c.l.b16 %v657
        %v745 = vunpack.c.h.b16 %v657
        %v746 = vunpack.c.l.b16 %v658
        %v747 = vunpack.c.h.b16 %v658
        %v748 = vunpack.c.l.b16 %v659
        %v749 = vunpack.c.h.b16 %v659
        %v750 = vunpack.c.l.b16 %v660
        %v751 = vunpack.c.h.b16 %v660
        %v752 = vunpack.c.l.b16 %v661
        %v753 = vunpack.c.h.b16 %v661
        %v754 = vunpack.c.l.b16 %v662
        %v755 = vunpack.c.h.b16 %v662
        %v756 = vunpack.c.l.b16 %v663
        %v757 = vunpack.c.h.b16 %v663
        %v758 = vunpack.c.l.b16 %v664
        %v759 = vunpack.c.h.b16 %v664
        %v760 = vunpack.c.l.b16 %v665
        %v761 = vunpack.c.h.b16 %v665
        %v762 = vpack.c.b16 %v702, %v698
        %v763 = vpack.c.b16 %v703, %v699
        %v764 = vpack.c.b16 %v704, %v700
        %v765 = vpack.c.b16 %v705, %v701
        %v766 = vpack.c.b16 %v710, %v706
        %v767 = vpack.c.b16 %v711, %v707
        %v768 = vpack.c.b16 %v712, %v708
        %v769 = vpack.c.b16 %v713, %v709
        %v770 = vpack.c.b16 %v718, %v714
        %v771 = vpack.c.b16 %v719, %v715
        %v772 = vpack.c.b16 %v720, %v716
        %v773 = vpack.c.b16 %v721, %v717
        %v774 = vpack.c.b16 %v726, %v722
        %v775 = vpack.c.b16 %v727, %v723
        %v776 = vpack.c.b16 %v728, %v724
        %v777 = vpack.c.b16 %v729, %v725
        %v778 = vpack.c.b16 %v734, %v730
        %v779 = vpack.c.b16 %v735, %v731
        %v780 = vpack.c.b16 %v736, %v732
        %v781 = vpack.c.b16 %v737, %v733
        %v782 = vpack.c.b16 %v742, %v738
        %v783 = vpack.c.b16 %v743, %v739
        %v784 = vpack.c.b16 %v744, %v740
        %v785 = vpack.c.b16 %v745, %v741
        %v786 = vpack.c.b16 %v750, %v746
        %v787 = vpack.c.b16 %v751, %v747
        %v788 = vpack.c.b16 %v752, %v748
        %v789 = vpack.c.b16 %v753, %v749
        %v790 = vpack.c.b16 %v758, %v754
        %v791 = vpack.c.b16 %v759, %v755
        %v792 = vpack.c.b16 %v760, %v756
        %v793 = vpack.c.b16 %v761, %v757
        %826 = vmatprep.subr.bf16.mxu0 %v791
        %827 = vmatpush1.bf16.msra.mxu0 %v790
        %828 = vmatprep.subr.bf16.mxu0 %v787
        %829 = vmatpush1.bf16.msra.mxu0 %v786
        %830 = vmatprep.subr.bf16.mxu0 %v783
        %831 = vmatpush1.bf16.msra.mxu0 %v782
        %832 = vmatprep.subr.bf16.mxu0 %v779
        %833 = vmatpush1.bf16.msra.mxu0 %v778
        %834 = vmatprep.subr.bf16.mxu0 %v775
        %835 = vmatpush1.bf16.msra.mxu0 %v774
        %836 = vmatprep.subr.bf16.mxu0 %v771
        %837 = vmatpush1.bf16.msra.mxu0 %v770
        %838 = vmatprep.subr.bf16.mxu0 %v767
        %839 = vmatpush1.bf16.msra.mxu0 %v766
        %840 = vmatprep.subr.bf16.mxu0 %v763
        %841 = vmatpush1.bf16.msra.mxu0 %v762
        %842 = vmatprep.subr.bf16.mxu0 0
        %843 = vmatpush2.bf16.msra.mxu0 0
        %844 = vmatprep.subr.bf16.mxu0 0
        %845 = vmatpush2.bf16.msra.mxu0 0
        %846 = vmatprep.subr.bf16.mxu0 0
        %847 = vmatpush2.bf16.msra.mxu0 0
        %848 = vmatprep.subr.bf16.mxu0 0
        %849 = vmatpush2.bf16.msra.mxu0 0
        %850 = vmatprep.subr.bf16.mxu0 0
        %851 = vmatpush2.bf16.msra.mxu0 0
        %852 = vmatprep.subr.bf16.mxu0 0
        %853 = vmatpush2.bf16.msra.mxu0 0
        %854 = vmatprep.subr.bf16.mxu0 0
        %855 = vmatpush2.bf16.msra.mxu0 0
        %856 = vmatprep.subr.bf16.mxu0 0
        %857 = vmatpush2.bf16.msra.mxu0 0
        %858 = vmatprep.mubr.bf16.mxu0 0
        %859 = vmatmul.mubr.bf16.gmra.mxu0 %v633
        %v860 = vpop.f32.mrf.mxu0
        %v861 = vadd.f32 0.0, %v860
        %v862 = vpop.f32.mrf.mxu0
        %v863 = vadd.f32 0.0, %v862
        %v864 = vpop.f32.mrf.mxu0
        %v865 = vpop.f32.mrf.mxu0
        %866 = vdwg.mxu0
        %867 = vmatprep.subr.bf16.mxu0 %v793
        %868 = vmatpush1.bf16.msra.mxu0 %v792
        %869 = vmatprep.subr.bf16.mxu0 %v789
        %870 = vmatpush1.bf16.msra.mxu0 %v788
        %871 = vmatprep.subr.bf16.mxu0 %v785
        %872 = vmatpush1.bf16.msra.mxu0 %v784
        %873 = vmatprep.subr.bf16.mxu0 %v781
        %874 = vmatpush1.bf16.msra.mxu0 %v780
        %875 = vmatprep.subr.bf16.mxu0 %v777
        %876 = vmatpush1.bf16.msra.mxu0 %v776
        %877 = vmatprep.subr.bf16.mxu0 %v773
        %878 = vmatpush1.bf16.msra.mxu0 %v772
        %879 = vmatprep.subr.bf16.mxu0 %v769
        %880 = vmatpush1.bf16.msra.mxu0 %v768
        %881 = vmatprep.subr.bf16.mxu0 %v765
        %882 = vmatpush1.bf16.msra.mxu0 %v764
        %883 = vmatprep.subr.bf16.mxu0 0
        %884 = vmatpush2.bf16.msra.mxu0 0
        %885 = vmatprep.subr.bf16.mxu0 0
        %886 = vmatpush2.bf16.msra.mxu0 0
        %887 = vmatprep.subr.bf16.mxu0 0
        %888 = vmatpush2.bf16.msra.mxu0 0
        %889 = vmatprep.subr.bf16.mxu0 0
        %890 = vmatpush2.bf16.msra.mxu0 0
        %891 = vmatprep.subr.bf16.mxu0 0
        %892 = vmatpush2.bf16.msra.mxu0 0
        %893 = vmatprep.subr.bf16.mxu0 0
        %894 = vmatpush2.bf16.msra.mxu0 0
        %895 = vmatprep.subr.bf16.mxu0 0
        %896 = vmatpush2.bf16.msra.mxu0 0
        %897 = vmatprep.subr.bf16.mxu0 0
        %898 = vmatpush2.bf16.msra.mxu0 0
        %899 = vmatprep.mubr.bf16.mxu0 0
        %900 = vmatmul.mubr.bf16.gmra.mxu0 %v633
        %v901 = vpop.f32.mrf.mxu0
        %v902 = vadd.f32 0.0, %v901
        %v903 = vpop.f32.mrf.mxu0
        %v904 = vadd.f32 0.0, %v903
        %v905 = vpop.f32.mrf.mxu0
        %v906 = vpop.f32.mrf.mxu0
        %907 = vdwg.mxu0
        %v912 = vcombine.low %v861, %v863
        %v913 = vcombine.low %v902, %v904
        %v915 = vunpack.c.l.s4 1983009808
        %v916 = vunpack.c.0.s8 %v915
        %v917 = vlaneseq
        %v918 = vshrl.u32 %v917, 7
        %v919 = vsub.s32 %v916, %v918
        %v920 = vrot.slane %v912, %v919
        %v922 = vunpack.c.l.s4 1983009808
        %v923 = vunpack.c.0.s8 %v922
        %v924 = vlaneseq
        %v925 = vshrl.u32 %v924, 7
        %v926 = vsub.s32 %v923, %v925
        %v927 = vrot.slane %v913, %v926
        %v928 = vcombine.low %v920, %v927
        %930 = vst [vmem:[%s246 + $0x8] sm:$0xff] %v928
        %s931 = sand.u32 %s135, 1
        %s932 = scalar_lea.sflag [#allocation5], %s931
        %s933 = sand.u32 %s135, 1
        %s934 = smul.addr %s933, 16
        %s935 = scalar_lea.vmem [#allocation8], %s934
        // Predicated region
        $region45: #{tpu_custom_call.1} parent=35 // pred_check
          %p936 = pneg %p145
        $region46: #{tpu_custom_call.1} parent=35 // pred_check_branch
          %938 = sbr.rel (%p936) target = $region48
        $region47: #{tpu_custom_call.1} parent=35 // pred_region
          %s939 = smul.u32 8, %s27
          %s941 = ssub.s32 256, 256
          %942 = vsyncadd %s932, %s941
          %s943 = smul.addr %s26, 8
          %s944 = sadd.s32 %s939, %s943
          %s945 = smul.addr %s944, 32
          %s946 = scalar_lea.hbm %s4, %s945
          %s948 = sshll.u32 %s935, 4
          %s949 = int_to_ptr.vmem [resolvable:$true] %s948
          %951 = dma.vmem_to_hbm [thread:$0]  %s949, 256, %s946, %s932
        $region48: #{tpu_custom_call.1} parent=35 // pred_fallthru
          _
      $region36: #{tpu_custom_call.1} parent=5 // pred_fallthru
        _
      %p952 = scmp.le.s32.totalorder 2, %s17
      // Predicated region
      $region49: #{tpu_custom_call.1} parent=5 // pred_check
        %p953 = pneg %p952
      $region50: #{tpu_custom_call.1} parent=5 // pred_check_branch
        %955 = sbr.rel (%p953) target = $region52
      $region51: #{tpu_custom_call.1} parent=5 // pred_region
        %s956 = ssub.s32 %s17, 2
        // Predicated region
        $region53: #{tpu_custom_call.1} parent=51 // pred_check
          %p957 = pneg %p151
        $region54: #{tpu_custom_call.1} parent=51 // pred_check_branch
          %959 = sbr.rel (%p957) target = $region56
        $region55: #{tpu_custom_call.1} parent=51 // pred_region
          %s960 = sand.u32 %s136, 1
          %s961 = scalar_lea.sflag [#allocation5], %s960
          %s962 = sand.u32 %s136, 1
          %s963 = smul.addr %s962, 16
          %s964 = scalar_lea.vmem [#allocation8], %s963
          %965 = dma.done %s961, 256
        $region56: #{tpu_custom_call.1} parent=51 // pred_fallthru
          _
      $region52: #{tpu_custom_call.1} parent=5 // pred_fallthru
        _
    $region6: #{tpu_custom_call.1} parent=1 // loop_footer
      %s21 = sadd.s32 1, %s17
    $region7: #{tpu_custom_call.1} parent=1 // loop_footer_branch
      %16 = sbr.rel target = $region3
    $region8: #{tpu_custom_call.1} parent=1 // loop_exit
      _
    %966 = vsyncpa [#allocation4], 1
    %s967 = scalar_lea.sflag [#allocation4], 1
    %968 = vsyncpa %s967, 1
    %969 = vsyncpa [#allocation7], 1
    %970 = vsyncpa [#allocation5], 1
    %s971 = scalar_lea.sflag [#allocation5], 1
    %972 = vsyncpa %s971, 1

</llo_original>
